<compile_context>
chip_gen: v6e
topology: v6e:2x2x1
jax: 0.10.0
libtpu: 0.0.40
codegen_flags: <defaults>
</compile_context>

<pallas_src>
import functools
import math
from typing import Any, NamedTuple

import jax
import jax.numpy as jnp
from jax.experimental import pallas as pl
from jax.experimental.pallas import tpu as pltpu


def _round_up(x, m):
    return (x + m - 1) // m * m


def _sublane_multiple(dtype):
    # Minimum second-minor tile multiple per element width (f32=8, bf16=16, int8/fp8=32).
    return {4: 8, 2: 16, 1: 32}.get(jnp.dtype(dtype).itemsize, 8)


def _vmem_capacity_bytes():
    try:
        cap = int(pltpu.get_tpu_info().vmem_capacity_bytes)
        if cap > 0:
            return cap
    except Exception:
        pass
    return 64 << 20  # conservative default: v7x per-TensorCore VMEM


# ---------------------------------------------------------------------------
# Kernels
# ---------------------------------------------------------------------------

def _swiglu_kernel_single_k(x_ref, w_ref, o_ref, *, tn):
    # x_ref: (tm, d_pad)  full-reduction row slab of x
    # w_ref: (d_pad, 2*tn) fused [U | V] column slab for output block j
    # o_ref: (tm, tn)      output tile (i, j)
    acc = jnp.dot(x_ref[...], w_ref[...], preferred_element_type=jnp.float32)
    up = acc[:, :tn]
    gate = acc[:, tn:]
    # SiLU(g) = g * sigmoid(g); epilogue stays f32 (v5e has no bf16 VPU/EUP).
    o_ref[...] = (up * gate * jax.nn.sigmoid(gate)).astype(o_ref.dtype)


def _swiglu_kernel_multi_k(x_ref, w_ref, o_ref, acc_ref, *, tn):
    # Fallback when the whole reduction dim does not fit VMEM.
    # x_ref: (tm, tk); w_ref: (tk, 2*tn); o_ref: (tm, tn); acc_ref: (tm, 2*tn) f32
    k = pl.program_id(2)

    @pl.when(k == 0)
    def _():
        acc_ref[...] = jnp.zeros_like(acc_ref)

    acc_ref[...] += jnp.dot(
        x_ref[...], w_ref[...], preferred_element_type=jnp.float32
    )

    @pl.when(k == pl.num_programs(2) - 1)
    def _():
        acc = acc_ref[...]
        up = acc[:, :tn]
        gate = acc[:, tn:]
        o_ref[...] = (up * gate * jax.nn.sigmoid(gate)).astype(o_ref.dtype)


# ---------------------------------------------------------------------------
# Weight preparation (hoist out of the hot path in real use)
# ---------------------------------------------------------------------------

class SwigluWeights(NamedTuple):
    w: jax.Array          # (d_pad, 2*d_pad) fused [U | V], interleaved per tn-block
    tn: int
    tk: int
    d_pad: int
    dim: int
    compute_dtype: Any


def _plan_feature_tiles(D, tn, tk):
    d128 = _round_up(D, 128)
    tn = min(tn, d128)
    tk = min(tk, d128)
    lcm = tn * tk // math.gcd(tn, tk)
    d_pad = _round_up(D, lcm)
    return tn, tk, d_pad


def prepare_swiglu(u_weight, v_weight, *, tn=256, tk=512,
                   compute_dtype=jnp.bfloat16):
    """Fuse PyTorch (out, in) U/V weights into one (d_pad, 2*d_pad) slab.

    For output block j (width tn), columns [2*j*tn, 2*j*tn+tn) hold the
    input_proj (U) columns and [2*j*tn+tn, 2*(j+1)*tn) the gate_proj (V)
    columns, so the kernel does a single matmul per tile and splits the
    product.  The layout is tied to the tn/d_pad returned here, so hoisting
    this (one full HBM copy of the weights) and reusing it is safe.
    """
    D = u_weight.shape[0]
    tn, tk, d_pad = _plan_feature_tiles(D, tn, tk)
    u_t = u_weight.T.astype(compute_dtype)   # (in, out)
    v_t = v_weight.T.astype(compute_dtype)
    if d_pad != D:
        pad = ((0, d_pad - D), (0, d_pad - D))
        u_t = jnp.pad(u_t, pad)
        v_t = jnp.pad(v_t, pad)
    n_j = d_pad // tn
    w = jnp.concatenate(
        [u_t.reshape(d_pad, n_j, tn), v_t.reshape(d_pad, n_j, tn)], axis=-1
    ).reshape(d_pad, 2 * d_pad)
    return SwigluWeights(w, tn, tk, d_pad, D, compute_dtype)


# ---------------------------------------------------------------------------
# Wrapper
# ---------------------------------------------------------------------------

def swiglu(x, u_weight=None, v_weight=None, *, prepared=None, tm=512,
           tn=256, tk=512, compute_dtype=jnp.bfloat16, force_multi_k=False):
    """x: [..., D]; u_weight / v_weight: [D, D] PyTorch (out, in) layout.

    Pass `prepared=prepare_swiglu(...)` to hoist weight prep out of the hot
    path (the tile parameters travel with the prepared weights).
    """
    if prepared is None:
        prepared = prepare_swiglu(u_weight, v_weight, tn=tn, tk=tk,
                                  compute_dtype=compute_dtype)
    w_fused, tn, tk, d_pad, D, compute_dtype = prepared

    orig_shape = x.shape
    assert orig_shape[-1] == D, "feature dim mismatch vs prepared weights"
    out_dtype = x.dtype

    x2 = x.reshape(-1, D)
    M = x2.shape[0]

    sub = _sublane_multiple(compute_dtype)
    tm = min(tm, _round_up(M, sub))
    m_pad = _round_up(M, tm)

    in_bpe = jnp.dtype(compute_dtype).itemsize
    out_bpe = jnp.dtype(out_dtype).itemsize
    capacity = _vmem_capacity_bytes()
    single_k_budget = min(int(0.6 * capacity), capacity - (8 << 20))

    # Footprint if the whole reduction dim lives in VMEM (tk = d_pad).
    single_k_bytes = (
        2 * tm * d_pad * in_bpe         # x row slab (double buffered)
        + 2 * d_pad * 2 * tn * in_bpe   # fused weight column slab (double buffered)
        + 2 * tm * tn * out_bpe         # output tile (double buffered)
    )
    use_single_k = (not force_multi_k) and (single_k_bytes <= single_k_budget)

    # Skip the pad / cast copy entirely when nothing changes.
    needs_copy = (m_pad != M) or (d_pad != D) or (x2.dtype != jnp.dtype(compute_dtype))
    if needs_copy:
        x2p = jnp.pad(x2.astype(compute_dtype), ((0, m_pad - M), (0, d_pad - D)))
    else:
        x2p = x2

    if use_single_k:
        # Grid (j, i): row axis innermost -> weight block index (0, j) is
        # unchanged across consecutive steps, so each weight slab is DMA'd once.
        grid = (d_pad // tn, m_pad // tm)
        vmem_needed = single_k_bytes
        call = pl.pallas_call(
            functools.partial(_swiglu_kernel_single_k, tn=tn),
            out_shape=jax.ShapeDtypeStruct((m_pad, d_pad), out_dtype),
            grid_spec=pltpu.PrefetchScalarGridSpec(
                num_scalar_prefetch=0,
                grid=grid,
                in_specs=[
                    pl.BlockSpec((tm, d_pad), lambda j, i: (i, 0)),
                    pl.BlockSpec((d_pad, 2 * tn), lambda j, i: (0, j)),
                ],
                out_specs=pl.BlockSpec((tm, tn), lambda j, i: (i, j)),
            ),
            compiler_params=pltpu.CompilerParams(
                dimension_semantics=("parallel", "parallel"),
                vmem_limit_bytes=int(min(max(vmem_needed + (4 << 20), 16 << 20),
                                         int(0.9 * capacity))),
            ),
        )
    else:
        # Large-D fallback: tile the reduction dim, K innermost ("arbitrary"),
        # f32 accumulator with pl.when init / finalize.
        grid = (m_pad // tm, d_pad // tn, d_pad // tk)
        vmem_needed = (
            2 * tm * tk * in_bpe
            + 2 * tk * 2 * tn * in_bpe
            + 2 * tm * tn * out_bpe
            + tm * 2 * tn * 4
        )
        # If DMA is still exposed on this path, deepen the weight pipeline via
        # pipeline_mode=pl.Buffered(3) on the second BlockSpec (costs one extra
        # weight tile of VMEM).
        call = pl.pallas_call(
            functools.partial(_swiglu_kernel_multi_k, tn=tn),
            out_shape=jax.ShapeDtypeStruct((m_pad, d_pad), out_dtype),
            grid_spec=pltpu.PrefetchScalarGridSpec(
                num_scalar_prefetch=0,
                grid=grid,
                in_specs=[
                    pl.BlockSpec((tm, tk), lambda i, j, k: (i, k)),
                    pl.BlockSpec((tk, 2 * tn), lambda i, j, k: (k, j)),
                ],
                out_specs=pl.BlockSpec((tm, tn), lambda i, j, k: (i, j)),
                scratch_shapes=[pltpu.VMEM((tm, 2 * tn), jnp.float32)],
            ),
            compiler_params=pltpu.CompilerParams(
                dimension_semantics=("parallel", "parallel", "arbitrary"),
                vmem_limit_bytes=int(min(max(vmem_needed + (4 << 20), 16 << 20),
                                         int(0.9 * capacity))),
            ),
        )

    out = call(x2p, w_fused)
    if (m_pad != M) or (d_pad != D):
        out = out[:M, :D]
    return out.reshape(orig_shape)


# ---------------------------------------------------------------------------
# Demo / correctness check
# ---------------------------------------------------------------------------

if __name__ == "__main__":
    key = jax.random.PRNGKey(0)
    kx, ku, kv = jax.random.split(key, 3)

    batch, seq, dim = 2, 8, 32

    x = jax.random.normal(kx, (batch, seq, dim), dtype=jnp.float32)
    # Deterministic init mimicking nn.Linear's uniform(-1/sqrt(dim), 1/sqrt(dim))
    bound = 1.0 / (dim ** 0.5)
    u_weight = jax.random.uniform(ku, (dim, dim), jnp.float32, -bound, bound)  # (out, in)
    v_weight = jax.random.uniform(kv, (dim, dim), jnp.float32, -bound, bound)  # (out, in)

    # Reference in plain JAX (same math as the PyTorch module).
    up_ref = x @ u_weight.T
    gate_ref = x @ v_weight.T
    ref = up_ref * (gate_ref * jax.nn.sigmoid(gate_ref))

    # 1) f32 compute: tight check of the single-K (primary) path.
    out_f32 = jax.block_until_ready(
        swiglu(x, u_weight, v_weight, compute_dtype=jnp.float32))
    assert out_f32.shape == ref.shape, "shape mismatch vs reference"
    assert jnp.allclose(out_f32, ref, atol=1e-4, rtol=1e-4), "f32 mismatch vs reference"

    # 2) Default bf16 compute (production path), looser tolerance.
    prep = prepare_swiglu(u_weight, v_weight)          # hoisted weight prep
    out_bf16 = jax.block_until_ready(swiglu(x, prepared=prep))
    assert jnp.allclose(out_bf16, ref, atol=3e-2, rtol=3e-2), "bf16 mismatch vs reference"

    # 3) Large-D fallback path (accumulator + pl.when) also exercised.
    out_mk = jax.block_until_ready(
        swiglu(x, u_weight, v_weight, compute_dtype=jnp.float32, force_multi_k=True))
    assert jnp.allclose(out_mk, ref, atol=1e-4, rtol=1e-4), "multi-K mismatch vs reference"

    print("KERNEL_OK")
</pallas_src>

<mosaic_0001>
module attributes {stable_mosaic.version = 11 : i64} {
  func.func @_swiglu_kernel_single_k(%arg0: i32, %arg1: i32, %arg2: memref<16x128xf32, #tpu.memory_space<vmem>>, %arg3: memref<128x256xf32, #tpu.memory_space<vmem>>, %arg4: memref<16x128xf32, #tpu.memory_space<vmem>>) attributes {dimension_semantics = [#tpu.dimension_semantics<parallel>, #tpu.dimension_semantics<parallel>], iteration_bounds = array<i64: 1, 1>, scalar_prefetch = 0 : i64, scratch_operands = 0 : i64, tpu.core_type = #tpu.core_type<tc>, window_params = [{transform_indices = @transform_0, window_bounds = array<i64: 16, 128>}, {transform_indices = @transform_1, window_bounds = array<i64: 128, 256>}, {transform_indices = @transform_2, window_bounds = array<i64: 16, 128>}]} {
    %c0 = arith.constant 0 : index
    %c0_0 = arith.constant 0 : index
    %0 = vector.load %arg2[%c0, %c0_0] : memref<16x128xf32, #tpu.memory_space<vmem>>, vector<16x128xf32>
    %c0_1 = arith.constant 0 : index
    %c0_2 = arith.constant 0 : index
    %1 = vector.load %arg3[%c0_1, %c0_2] : memref<128x256xf32, #tpu.memory_space<vmem>>, vector<128x256xf32>
    %cst = arith.constant dense<0.000000e+00> : vector<16x256xf32>
    %2 = tpu.matmul %0, %1, %cst {dimension_numbers = #tpu.dot_dimension_numbers<[1], [0], [0], [1], [0, 0, 1, 1], [], []>} : vector<16x128xf32>, vector<128x256xf32>, vector<16x256xf32> -> vector<16x256xf32>
    %3 = vector.extract_strided_slice %2 {offsets = [0, 0], sizes = [16, 128], strides = [1, 1]} : vector<16x256xf32> to vector<16x128xf32>
    %4 = vector.extract_strided_slice %2 {offsets = [0, 128], sizes = [16, 128], strides = [1, 1]} : vector<16x256xf32> to vector<16x128xf32>
    %5 = arith.mulf %3, %4 : vector<16x128xf32>
    %6 = arith.negf %4 : vector<16x128xf32>
    %7 = math.exp %6 : vector<16x128xf32>
    %cst_3 = arith.constant 1.000000e+00 : f32
    %8 = vector.broadcast %cst_3 : f32 to vector<16x128xf32>
    %9 = arith.addf %8, %7 : vector<16x128xf32>
    %10 = arith.divf %8, %9 : vector<16x128xf32>
    %11 = arith.mulf %5, %10 : vector<16x128xf32>
    %c0_4 = arith.constant 0 : index
    %c0_5 = arith.constant 0 : index
    %12 = vector.load %arg4[%c0_4, %c0_5] : memref<16x128xf32, #tpu.memory_space<vmem>>, vector<16x128xf32>
    tpu.vector_store %arg4[%c0_4, %c0_5], %11 {strides = array<i32>} : memref<16x128xf32, #tpu.memory_space<vmem>>, vector<16x128xf32>,
    return
  }
  func.func @transform_0(%arg0: i32, %arg1: i32) -> (i32, i32) {
    %c0_i32 = arith.constant 0 : i32
    %c0_i32_0 = arith.constant 0 : i32
    return %arg1, %c0_i32 : i32, i32
  }
  func.func @transform_1(%arg0: i32, %arg1: i32) -> (i32, i32) {
    %c0_i32 = arith.constant 0 : i32
    %c0_i32_0 = arith.constant 0 : i32
    return %c0_i32, %arg0 : i32, i32
  }
  func.func @transform_2(%arg0: i32, %arg1: i32) -> (i32, i32) {
    %c0_i32 = arith.constant 0 : i32
    return %arg1, %arg0 : i32, i32
  }
}

</mosaic_0001>

<llo_original>
// kernel: tpu_custom_call.1
$region0: #{tpu_custom_call.1}
  #allocation0 [shape = 'u32[]', space=smem, size = 0x4, offset = 0x4, fixed_abs, tag = 'smem constant byte address 0x4 - core index']
  #allocation1 [shape = 'u32[144,128]{1,0:T(1,128)}', space=vmem, size = 0x12000, scoped, tag = 'internal scratch']
  %s0 = inlined_call_operand.hbm [shape: f32[16,128], index: 0, kind: input, shape index: {}]
  %s1 = inlined_call_operand.hbm [shape: f32[128,256], index: 1, kind: input, shape index: {}]
  %s2 = inlined_call_operand.hbm [shape: f32[16,128], index: 2, kind: output, shape index: {}]
  %s3 = sld [smem:[#allocation0]]
  $region26: #{tpu_custom_call.1} parent=0
    _
  %s5 = ssub.s32 1, %s3
  %s6 = scalar_select 0, %s5, %s3
  $region1: #{tpu_custom_call.1} parent=0
    #allocation2 [shape = 'u8[8192]{0}', space=vmem, size = 0x2000, scoped, tag = 'input window, operand 0, single buffered']
    #allocation3 [shape = 's32[1]{0}', space=sflag, size = 0x4, scoped, tag = 'scoped memory for tpu_custom_call.1']
    #allocation4 [shape = 's32[1]{0}', space=sflag, size = 0x4, scoped, tag = 'scoped memory for tpu_custom_call.1']
    #allocation5 [shape = 'u8[131072]{0}', space=vmem, size = 0x20000, scoped, tag = 'input window, operand 1, single buffered']
    #allocation6 [shape = 's32[1]{0}', space=sflag, size = 0x4, scoped, tag = 'scoped memory for tpu_custom_call.1']
    #allocation7 [shape = 'u8[8192]{0}', space=vmem, size = 0x2000, scoped, tag = 'output window, operand 0, single buffered']
    %7 = vsyncpa [#allocation3], 0
    %8 = vsyncpa [#allocation6], 0
    %9 = vsyncpa [#allocation4], 0
    // Predicated region
    $region2: #{tpu_custom_call.1} parent=1 // pred_check
      _
    $region3: #{tpu_custom_call.1} parent=1 // pred_check_branch
      %11 = sbr.rel (0) target = $region5
    $region4: #{tpu_custom_call.1} parent=1 // pred_region
      %s13 = ssub.s32 256, 256
      %14 = vsyncadd [#allocation3], %s13
      %s15 = sshll.u32 [#allocation2], 4
      %s16 = int_to_ptr.vmem [resolvable:$true] %s15
      %21 = dma.hbm_to_vmem [thread:$0]  %s0, 256, %s16, [#allocation3], 128, 128, 8
    $region5: #{tpu_custom_call.1} parent=1 // pred_fallthru
      _
    // Predicated region
    $region6: #{tpu_custom_call.1} parent=1 // pred_check
      _
    $region7: #{tpu_custom_call.1} parent=1 // pred_check_branch
      %23 = sbr.rel (0) target = $region9
    $region8: #{tpu_custom_call.1} parent=1 // pred_region
      %s25 = ssub.s32 4096, 4096
      %26 = vsyncadd [#allocation6], %s25
      %s27 = sshll.u32 [#allocation5], 4
      %s28 = int_to_ptr.vmem [resolvable:$true] %s27
      %33 = dma.hbm_to_vmem [thread:$0]  %s1, 4096, %s28, [#allocation6], 256, 256, 16
    $region9: #{tpu_custom_call.1} parent=1 // pred_fallthru
      _
    // Predicated region
    $region10: #{tpu_custom_call.1} parent=1 // pred_check
      _
    $region11: #{tpu_custom_call.1} parent=1 // pred_check_branch
      %35 = sbr.rel (0) target = $region13
    $region12: #{tpu_custom_call.1} parent=1 // pred_region
      %36 = dma.done [#allocation3], 256
    $region13: #{tpu_custom_call.1} parent=1 // pred_fallthru
      _
    // Predicated region
    $region14: #{tpu_custom_call.1} parent=1 // pred_check
      _
    $region15: #{tpu_custom_call.1} parent=1 // pred_check_branch
      %38 = sbr.rel (0) target = $region17
    $region16: #{tpu_custom_call.1} parent=1 // pred_region
      %39 = dma.done [#allocation6], 4096
    $region17: #{tpu_custom_call.1} parent=1 // pred_fallthru
      _
    %v40 = vld [vmem:[#allocation2] sm:$0xff]
    %v41 = vld [vmem:[#allocation2 + $0x8] sm:$0xff]
    %v42 = vld [vmem:[#allocation5] sm:$0xff]
    %v43 = vld [vmem:[#allocation5 + $0x8] sm:$0xff]
    %v44 = vld [vmem:[#allocation5 + $0x10] sm:$0xff]
    %v45 = vld [vmem:[#allocation5 + $0x18] sm:$0xff]
    %v46 = vld [vmem:[#allocation5 + $0x20] sm:$0xff]
    %v47 = vld [vmem:[#allocation5 + $0x28] sm:$0xff]
    %v48 = vld [vmem:[#allocation5 + $0x30] sm:$0xff]
    %v49 = vld [vmem:[#allocation5 + $0x38] sm:$0xff]
    %v50 = vld [vmem:[#allocation5 + $0x40] sm:$0xff]
    %v51 = vld [vmem:[#allocation5 + $0x48] sm:$0xff]
    %v52 = vld [vmem:[#allocation5 + $0x50] sm:$0xff]
    %v53 = vld [vmem:[#allocation5 + $0x58] sm:$0xff]
    %v54 = vld [vmem:[#allocation5 + $0x60] sm:$0xff]
    %v55 = vld [vmem:[#allocation5 + $0x68] sm:$0xff]
    %v56 = vld [vmem:[#allocation5 + $0x70] sm:$0xff]
    %v57 = vld [vmem:[#allocation5 + $0x78] sm:$0xff]
    %v58 = vld [vmem:[#allocation5 + $0x80] sm:$0xff]
    %v59 = vld [vmem:[#allocation5 + $0x88] sm:$0xff]
    %v60 = vld [vmem:[#allocation5 + $0x90] sm:$0xff]
    %v61 = vld [vmem:[#allocation5 + $0x98] sm:$0xff]
    %v62 = vld [vmem:[#allocation5 + $0xa0] sm:$0xff]
    %v63 = vld [vmem:[#allocation5 + $0xa8] sm:$0xff]
    %v64 = vld [vmem:[#allocation5 + $0xb0] sm:$0xff]
    %v65 = vld [vmem:[#allocation5 + $0xb8] sm:$0xff]
    %v66 = vld [vmem:[#allocation5 + $0xc0] sm:$0xff]
    %v67 = vld [vmem:[#allocation5 + $0xc8] sm:$0xff]
    %v68 = vld [vmem:[#allocation5 + $0xd0] sm:$0xff]
    %v69 = vld [vmem:[#allocation5 + $0xd8] sm:$0xff]
    %v70 = vld [vmem:[#allocation5 + $0xe0] sm:$0xff]
    %v71 = vld [vmem:[#allocation5 + $0xe8] sm:$0xff]
    %v72 = vld [vmem:[#allocation5 + $0xf0] sm:$0xff]
    %v73 = vld [vmem:[#allocation5 + $0xf8] sm:$0xff]
    %74 = vmatprep.subr.mxu0 %v73
    %75 = vmatpush1.msra.mxu0 %v72
    %76 = vmatprep.subr.mxu0 %v71
    %77 = vmatpush1.msra.mxu0 %v70
    %78 = vmatprep.subr.mxu0 %v69
    %79 = vmatpush1.msra.mxu0 %v68
    %80 = vmatprep.subr.mxu0 %v67
    %81 = vmatpush1.msra.mxu0 %v66
    %82 = vmatprep.subr.mxu0 %v65
    %83 = vmatpush1.msra.mxu0 %v64
    %84 = vmatprep.subr.mxu0 %v63
    %85 = vmatpush1.msra.mxu0 %v62
    %86 = vmatprep.subr.mxu0 %v61
    %87 = vmatpush1.msra.mxu0 %v60
    %88 = vmatprep.subr.mxu0 %v59
    %89 = vmatpush1.msra.mxu0 %v58
    %90 = vmatprep.subr.mxu0 %v57
    %91 = vmatpush1.msra.mxu0 %v56
    %92 = vmatprep.subr.mxu0 %v55
    %93 = vmatpush1.msra.mxu0 %v54
    %94 = vmatprep.subr.mxu0 %v53
    %95 = vmatpush1.msra.mxu0 %v52
    %96 = vmatprep.subr.mxu0 %v51
    %97 = vmatpush1.msra.mxu0 %v50
    %98 = vmatprep.subr.mxu0 %v49
    %99 = vmatpush1.msra.mxu0 %v48
    %100 = vmatprep.subr.mxu0 %v47
    %101 = vmatpush1.msra.mxu0 %v46
    %102 = vmatprep.subr.mxu0 %v45
    %103 = vmatpush1.msra.mxu0 %v44
    %104 = vmatprep.subr.mxu0 %v43
    %105 = vmatpush1.msra.mxu0 %v42
    %106 = vmatprep.subr.mxu0 0.0
    %107 = vmatpush2.msra.mxu0 0.0
    %108 = vmatprep.subr.mxu0 0.0
    %109 = vmatpush2.msra.mxu0 0.0
    %110 = vmatprep.subr.mxu0 0.0
    %111 = vmatpush2.msra.mxu0 0.0
    %112 = vmatprep.subr.mxu0 0.0
    %113 = vmatpush2.msra.mxu0 0.0
    %114 = vmatprep.subr.mxu0 0.0
    %115 = vmatpush2.msra.mxu0 0.0
    %116 = vmatprep.subr.mxu0 0.0
    %117 = vmatpush2.msra.mxu0 0.0
    %118 = vmatprep.subr.mxu0 0.0
    %119 = vmatpush2.msra.mxu0 0.0
    %120 = vmatprep.subr.mxu0 0.0
    %121 = vmatpush2.msra.mxu0 0.0
    %122 = vmatprep.subr.mxu0 0.0
    %123 = vmatpush2.msra.mxu0 0.0
    %124 = vmatprep.subr.mxu0 0.0
    %125 = vmatpush2.msra.mxu0 0.0
    %126 = vmatprep.subr.mxu0 0.0
    %127 = vmatpush2.msra.mxu0 0.0
    %128 = vmatprep.subr.mxu0 0.0
    %129 = vmatpush2.msra.mxu0 0.0
    %130 = vmatprep.subr.mxu0 0.0
    %131 = vmatpush2.msra.mxu0 0.0
    %132 = vmatprep.subr.mxu0 0.0
    %133 = vmatpush2.msra.mxu0 0.0
    %134 = vmatprep.subr.mxu0 0.0
    %135 = vmatpush2.msra.mxu0 0.0
    %136 = vmatprep.subr.mxu0 0.0
    %137 = vmatpush2.msra.mxu0 0.0
    %138 = vmatprep.mubr.f32.mxu0 0.0
    %139 = vmatmul.mubr.f32.gmra.mxu0 %v40
    %v140 = vpop.f32.mrf.mxu0
    %v141 = vadd.f32 0.0, %v140
    %v142 = vpop.f32.mrf.mxu0
    %v143 = vadd.f32 0.0, %v142
    %144 = vmatprep.mubr.f32.mxu0 0.0
    %145 = vmatmul.mubr.f32.gmra.mxu0 %v41
    %v146 = vpop.f32.mrf.mxu0
    %v147 = vadd.f32 0.0, %v146
    %v148 = vpop.f32.mrf.mxu0
    %v149 = vadd.f32 0.0, %v148
    %150 = vdwg.mxu0
    %v151 = vmul.f32 %v141, %v143
    %v152 = vmul.f32 %v147, %v149
    %v153 = vxor.u32 %v143, 2147483648
    %v154 = vxor.u32 %v149, 2147483648
    %v155 = vmul.f32 %v153, 1.442695
    %v156 = vpow.pop %v155
    %v157 = vmul.f32 %v154, 1.442695
    %v158 = vpow.pop %v157
    %v159 = vadd.f32 %v156, 1.0
    %v160 = vadd.f32 %v158, 1.0
    %v161 = vrcp.pop %v159
    %v162 = vmul.f32 1.0, %v161
    %v163 = vrcp.pop %v160
    %v164 = vmul.f32 1.0, %v163
    %v165 = vmul.f32 %v151, %v162
    %v166 = vmul.f32 %v152, %v164
    %167 = vst [vmem:[#allocation7] sm:$0xff] %v165
    %168 = vst [vmem:[#allocation7 + $0x8] sm:$0xff] %v166
    // Predicated region
    $region18: #{tpu_custom_call.1} parent=1 // pred_check
      _
    $region19: #{tpu_custom_call.1} parent=1 // pred_check_branch
      %170 = sbr.rel (0) target = $region21
    $region20: #{tpu_custom_call.1} parent=1 // pred_region
      %s172 = ssub.s32 256, 256
      %173 = vsyncadd [#allocation4], %s172
      %s174 = sshll.u32 [#allocation7], 4
      %s175 = int_to_ptr.vmem [resolvable:$true] %s174
      %180 = dma.vmem_to_hbm [thread:$0]  %s175, 256, %s2, [#allocation4], 128, 128, 8
    $region21: #{tpu_custom_call.1} parent=1 // pred_fallthru
      _
    // Predicated region
    $region22: #{tpu_custom_call.1} parent=1 // pred_check
      _
    $region23: #{tpu_custom_call.1} parent=1 // pred_check_branch
      %182 = sbr.rel (0) target = $region25
    $region24: #{tpu_custom_call.1} parent=1 // pred_region
      %183 = dma.done [#allocation4], 256
    $region25: #{tpu_custom_call.1} parent=1 // pred_fallthru
      _
    %184 = vsyncpa [#allocation3], 1
    %185 = vsyncpa [#allocation6], 1
    %186 = vsyncpa [#allocation4], 1

</llo_original>
